<compile_context>
chip_gen: v7x
topology: tpu7x:2x2x1
jax: 0.10.0
libtpu: 0.0.40
codegen_flags: <defaults>
</compile_context>

<pallas_src>
import functools

import jax
import jax.numpy as jnp
from jax.experimental import pallas as pl
from jax.experimental.pallas import tpu as pltpu

NEG_SLOPE = 0.01   # nn.LeakyReLU() default negative_slope
LANE = 128
SUBLANE = 8


def _round_up(n, m):
    return (n + m - 1) // m * m


def _leaky_relu(v):
    return jnp.where(v > 0, v, NEG_SLOPE * v)


def linear_block_kernel(x_ref, w1t_ref, b1_ref, w2t_ref, b2_ref, o_ref):
    # x tile stays in f32 for the residual / epilogue.
    x = x_ref[...]

    # Layer 1: bf16 MXU pass, f32 accumulation, f32 epilogue.
    y = jnp.dot(x.astype(w1t_ref.dtype), w1t_ref[...],
                preferred_element_type=jnp.float32)
    y = _leaky_relu(y + b1_ref[...])

    # Layer 2.
    y = jnp.dot(y.astype(w2t_ref.dtype), w2t_ref[...],
                preferred_element_type=jnp.float32)
    y = y + b2_ref[...]

    # Residual + LeakyReLU, all f32.
    o_ref[...] = _leaky_relu(x + y).astype(o_ref.dtype)


def prepare_params(w1, b1, w2, b2, *, compute_dtype=jnp.bfloat16):
    """One-time (init) prep: transpose PyTorch (out,in) weights to (in,out),
    zero-pad the feature dim to a multiple of 128 lanes, cast weights to the
    MXU compute dtype. Keeps the per-call jitted path free of transposes."""
    H = w1.shape[0]
    Hp = _round_up(H, LANE)

    def prep_w(w):
        wt = jnp.asarray(w, jnp.float32).T                     # (in, out)
        wt = jnp.pad(wt, ((0, Hp - H), (0, Hp - H)))
        return wt.astype(compute_dtype)

    def prep_b(b):
        br = jnp.asarray(b, jnp.float32).reshape(1, H)
        return jnp.pad(br, ((0, 0), (0, Hp - H)))              # biases stay f32

    return prep_w(w1), prep_b(b1), prep_w(w2), prep_b(b2)


@functools.partial(jax.jit, static_argnames=("block_b",))
def linear_block(x, w1t, b1r, w2t, b2r, *, block_b=256):
    """x: (B, H) f32.  w1t/w2t: (Hp, Hp) bf16 pre-transposed+padded weights.
    b1r/b2r: (1, Hp) f32 padded biases (from prepare_params)."""
    B, H = x.shape
    Hp = w1t.shape[0]

    # Batch tile: as large as requested (multiple of 8 sublanes), clamped to B.
    bb = min(block_b, _round_up(B, SUBLANE))
    Bp = _round_up(B, bb)

    xp = x
    if Bp != B or Hp != H:
        xp = jnp.pad(x, ((0, Bp - B), (0, Hp - H)))

    wbytes = int(w1t.dtype.itemsize)
    cost = pl.CostEstimate(
        flops=4 * Bp * Hp * Hp,
        transcendentals=0,
        bytes_accessed=2 * Bp * Hp * 4 + 2 * Hp * Hp * wbytes + 2 * Hp * 4,
    )

    # Weights / biases: constant block index -> DMA'd once; single-buffer them
    # so resident weight VMEM is Hp*Hp*itemsize per matrix instead of 2x.
    w_spec = pl.BlockSpec((Hp, Hp), lambda i: (0, 0),
                          pipeline_mode=pl.Buffered(buffer_count=1))
    b_spec = pl.BlockSpec((1, Hp), lambda i: (0, 0),
                          pipeline_mode=pl.Buffered(buffer_count=1))

    out = pl.pallas_call(
        linear_block_kernel,
        out_shape=jax.ShapeDtypeStruct((Bp, Hp), x.dtype),
        grid_spec=pltpu.PrefetchScalarGridSpec(
            num_scalar_prefetch=0,
            grid=(Bp // bb,),
            in_specs=[
                pl.BlockSpec((bb, Hp), lambda i: (i, 0)),   # x tile
                w_spec,                                     # W1^T (resident)
                b_spec,                                     # b1
                w_spec,                                     # W2^T (resident)
                b_spec,                                     # b2
            ],
            out_specs=pl.BlockSpec((bb, Hp), lambda i: (i, 0)),
        ),
        compiler_params=pltpu.CompilerParams(
            # Batch axis is independent -> shardable across TensorCores (v7x).
            dimension_semantics=("parallel",),
            # Well above the 16/32 MiB scoped defaults; safe on all generations.
            vmem_limit_bytes=64 * 1024 * 1024,
        ),
        cost_estimate=cost,
    )(xp, w1t, b1r, w2t, b2r)

    if Bp != B or Hp != H:
        out = out[:B, :H]
    return out


def _ref_forward_bf16(x, w1, b1, w2, b2, compute_dtype=jnp.bfloat16):
    """Reference that mirrors the kernel numerics (bf16 MXU operands, f32 acc)."""
    def lrelu(v):
        return jnp.where(v > 0, v, NEG_SLOPE * v)

    y = jnp.dot(x.astype(compute_dtype), w1.T.astype(compute_dtype),
                preferred_element_type=jnp.float32) + b1
    y = lrelu(y)
    y = jnp.dot(y.astype(compute_dtype), w2.T.astype(compute_dtype),
                preferred_element_type=jnp.float32) + b2
    return lrelu(x + y)


def _ref_forward_f32(x, w1, b1, w2, b2):
    def lrelu(v):
        return jnp.where(v > 0, v, NEG_SLOPE * v)

    y = lrelu(x @ w1.T + b1)
    y = y @ w2.T + b2
    return lrelu(x + y)


if __name__ == "__main__":
    linear_size = 32
    batch = 8

    key = jax.random.PRNGKey(0)
    kx, k1, k2, k3, k4 = jax.random.split(key, 5)

    # Deterministic init matching nn.Linear's U(-1/sqrt(in), 1/sqrt(in)).
    bound = 1.0 / (linear_size ** 0.5)
    x = jax.random.normal(kx, (batch, linear_size), dtype=jnp.float32)
    w1 = jax.random.uniform(k1, (linear_size, linear_size), jnp.float32, -bound, bound)
    b1 = jax.random.uniform(k2, (linear_size,), jnp.float32, -bound, bound)
    w2 = jax.random.uniform(k3, (linear_size, linear_size), jnp.float32, -bound, bound)
    b2 = jax.random.uniform(k4, (linear_size,), jnp.float32, -bound, bound)

    # One-time weight prep (transpose / pad / bf16 cast) outside the hot path.
    w1t, b1r, w2t, b2r = prepare_params(w1, b1, w2, b2)

    out = linear_block(x, w1t, b1r, w2t, b2r)
    jax.block_until_ready(out)

    assert out.shape == (batch, linear_size)
    ref_bf16 = _ref_forward_bf16(x, w1, b1, w2, b2)
    ref_f32 = _ref_forward_f32(x, w1, b1, w2, b2)
    assert jnp.allclose(out, ref_bf16, atol=1e-2, rtol=1e-2), "mismatch vs bf16 reference"
    assert jnp.allclose(out, ref_f32, atol=1e-1, rtol=1e-1), "gross mismatch vs f32 reference"

    print("KERNEL_OK")
</pallas_src>

<mosaic_0001>
module attributes {stable_mosaic.version = 11 : i64} {
  func.func @linear_block_kernel(%arg0: i32, %arg1: memref<8x128xf32, #tpu.memory_space<vmem>>, %arg2: memref<128x128xbf16, #tpu.memory_space<vmem>>, %arg3: memref<1x128xf32, #tpu.memory_space<vmem>>, %arg4: memref<128x128xbf16, #tpu.memory_space<vmem>>, %arg5: memref<1x128xf32, #tpu.memory_space<vmem>>, %arg6: memref<8x128xf32, #tpu.memory_space<vmem>>) attributes {dimension_semantics = [#tpu.dimension_semantics<parallel>], iteration_bounds = array<i64: 1>, scalar_prefetch = 0 : i64, scratch_operands = 0 : i64, tpu.core_type = #tpu.core_type<tc>, window_params = [{transform_indices = @transform_0, window_bounds = array<i64: 8, 128>}, {pipeline_mode = #tpu.pipeline_mode<synchronous>, transform_indices = @transform_1, window_bounds = array<i64: 128, 128>}, {pipeline_mode = #tpu.pipeline_mode<synchronous>, transform_indices = @transform_2, window_bounds = array<i64: 1, 128>}, {pipeline_mode = #tpu.pipeline_mode<synchronous>, transform_indices = @transform_3, window_bounds = array<i64: 128, 128>}, {pipeline_mode = #tpu.pipeline_mode<synchronous>, transform_indices = @transform_4, window_bounds = array<i64: 1, 128>}, {transform_indices = @transform_5, window_bounds = array<i64: 8, 128>}]} {
    %c0 = arith.constant 0 : index
    %c0_0 = arith.constant 0 : index
    %0 = vector.load %arg1[%c0, %c0_0] : memref<8x128xf32, #tpu.memory_space<vmem>>, vector<8x128xf32>
    %1 = arith.truncf %0 : vector<8x128xf32> to vector<8x128xbf16>
    %c0_1 = arith.constant 0 : index
    %c0_2 = arith.constant 0 : index
    %2 = vector.load %arg2[%c0_1, %c0_2] : memref<128x128xbf16, #tpu.memory_space<vmem>>, vector<128x128xbf16>
    %cst = arith.constant dense<0.000000e+00> : vector<8x128xf32>
    %3 = tpu.matmul %1, %2, %cst {dimension_numbers = #tpu.dot_dimension_numbers<[1], [0], [0], [1], [0, 0, 1, 1], [], []>} : vector<8x128xbf16>, vector<128x128xbf16>, vector<8x128xf32> -> vector<8x128xf32>
    %c0_3 = arith.constant 0 : index
    %c0_4 = arith.constant 0 : index
    %4 = vector.load %arg3[%c0_3, %c0_4] : memref<1x128xf32, #tpu.memory_space<vmem>>, vector<1x128xf32>
    %5 = vector.broadcast %4 : vector<1x128xf32> to vector<8x128xf32>
    %6 = arith.addf %3, %5 : vector<8x128xf32>
    %cst_5 = arith.constant 0.000000e+00 : f32
    %7 = vector.broadcast %cst_5 : f32 to vector<8x128xf32>
    %8 = arith.cmpf ogt, %6, %7 : vector<8x128xf32>
    %cst_6 = arith.constant 0.00999999977 : f32
    %9 = vector.broadcast %cst_6 : f32 to vector<8x128xf32>
    %10 = arith.mulf %9, %6 : vector<8x128xf32>
    %11 = arith.select %8, %6, %10 : vector<8x128xi1>, vector<8x128xf32>
    %12 = arith.truncf %11 : vector<8x128xf32> to vector<8x128xbf16>
    %c0_7 = arith.constant 0 : index
    %c0_8 = arith.constant 0 : index
    %13 = vector.load %arg4[%c0_7, %c0_8] : memref<128x128xbf16, #tpu.memory_space<vmem>>, vector<128x128xbf16>
    %cst_9 = arith.constant dense<0.000000e+00> : vector<8x128xf32>
    %14 = tpu.matmul %12, %13, %cst_9 {dimension_numbers = #tpu.dot_dimension_numbers<[1], [0], [0], [1], [0, 0, 1, 1], [], []>} : vector<8x128xbf16>, vector<128x128xbf16>, vector<8x128xf32> -> vector<8x128xf32>
    %c0_10 = arith.constant 0 : index
    %c0_11 = arith.constant 0 : index
    %15 = vector.load %arg5[%c0_10, %c0_11] : memref<1x128xf32, #tpu.memory_space<vmem>>, vector<1x128xf32>
    %16 = vector.broadcast %15 : vector<1x128xf32> to vector<8x128xf32>
    %17 = arith.addf %14, %16 : vector<8x128xf32>
    %18 = arith.addf %0, %17 : vector<8x128xf32>
    %cst_12 = arith.constant 0.000000e+00 : f32
    %19 = vector.broadcast %cst_12 : f32 to vector<8x128xf32>
    %20 = arith.cmpf ogt, %18, %19 : vector<8x128xf32>
    %cst_13 = arith.constant 0.00999999977 : f32
    %21 = vector.broadcast %cst_13 : f32 to vector<8x128xf32>
    %22 = arith.mulf %21, %18 : vector<8x128xf32>
    %23 = arith.select %20, %18, %22 : vector<8x128xi1>, vector<8x128xf32>
    %c0_14 = arith.constant 0 : index
    %c0_15 = arith.constant 0 : index
    %24 = vector.load %arg6[%c0_14, %c0_15] : memref<8x128xf32, #tpu.memory_space<vmem>>, vector<8x128xf32>
    tpu.vector_store %arg6[%c0_14, %c0_15], %23 {strides = array<i32>} : memref<8x128xf32, #tpu.memory_space<vmem>>, vector<8x128xf32>,
    return
  }
  func.func @transform_0(%arg0: i32) -> (i32, i32) {
    %c0_i32 = arith.constant 0 : i32
    %c0_i32_0 = arith.constant 0 : i32
    return %arg0, %c0_i32 : i32, i32
  }
  func.func @transform_1(%arg0: i32) -> (i32, i32) {
    %c0_i32 = arith.constant 0 : i32
    %c0_i32_0 = arith.constant 0 : i32
    %c0_i32_1 = arith.constant 0 : i32
    return %c0_i32, %c0_i32_0 : i32, i32
  }
  func.func @transform_2(%arg0: i32) -> (i32, i32) {
    %c0_i32 = arith.constant 0 : i32
    %c0_i32_0 = arith.constant 0 : i32
    %c0_i32_1 = arith.constant 0 : i32
    return %c0_i32, %c0_i32_0 : i32, i32
  }
  func.func @transform_3(%arg0: i32) -> (i32, i32) {
    %c0_i32 = arith.constant 0 : i32
    %c0_i32_0 = arith.constant 0 : i32
    %c0_i32_1 = arith.constant 0 : i32
    return %c0_i32, %c0_i32_0 : i32, i32
  }
  func.func @transform_4(%arg0: i32) -> (i32, i32) {
    %c0_i32 = arith.constant 0 : i32
    %c0_i32_0 = arith.constant 0 : i32
    %c0_i32_1 = arith.constant 0 : i32
    return %c0_i32, %c0_i32_0 : i32, i32
  }
  func.func @transform_5(%arg0: i32) -> (i32, i32) {
    %c0_i32 = arith.constant 0 : i32
    %c0_i32_0 = arith.constant 0 : i32
    return %arg0, %c0_i32 : i32, i32
  }
}

</mosaic_0001>

<llo_original>
// kernel: linear_block.1
$region0: #{linear_block.1}
  #allocation0 [shape = 'u32[]', space=smem, size = 0x4, offset = 0x4, fixed_abs, tag = 'smem constant byte address 0x4 - core index']
  #allocation1 [shape = 'u32[144,128]{1,0:T(1,128)}', space=vmem, size = 0x12000, scoped, tag = 'internal scratch']
  %s0 = inlined_call_operand.hbm [shape: f32[8,128], index: 0, kind: input, shape index: {}]
  %s1 = inlined_call_operand.hbm [shape: bf16[128,128], index: 1, kind: input, shape index: {}]
  %s2 = inlined_call_operand.hbm [shape: f32[1,128], index: 2, kind: input, shape index: {}]
  %s3 = inlined_call_operand.hbm [shape: bf16[128,128], index: 3, kind: input, shape index: {}]
  %s4 = inlined_call_operand.hbm [shape: f32[1,128], index: 4, kind: input, shape index: {}]
  %s5 = inlined_call_operand.hbm [shape: f32[8,128], index: 5, kind: output, shape index: {}]
  %s6 = sld [smem:[#allocation0]]
  $region50: #{linear_block.1} parent=0
    _
  %s8 = ssub.s32 1, %s6
  %s9 = scalar_select 0, %s8, %s6
  $region1: #{linear_block.1} parent=0
    #allocation2 [shape = 'u8[4096]{0}', space=vmem, size = 0x1000, scoped, tag = 'input window, operand 0, single buffered']
    #allocation3 [shape = 's32[1]{0}', space=sflag, size = 0x4, scoped, tag = 'scoped memory for linear_block.1']
    #allocation4 [shape = 's32[1]{0}', space=sflag, size = 0x4, scoped, tag = 'scoped memory for linear_block.1']
    #allocation5 [shape = 'u8[32768]{0}', space=vmem, size = 0x8000, scoped, tag = 'input window, operand 1, single buffered']
    #allocation6 [shape = 's32[1]{0}', space=sflag, size = 0x4, scoped, tag = 'scoped memory for linear_block.1']
    #allocation7 [shape = 'u8[512]{0}', space=vmem, size = 0x400, scoped, tag = 'input window, operand 2, single buffered']
    #allocation8 [shape = 'u8[32768]{0}', space=vmem, size = 0x8000, scoped, tag = 'input window, operand 3, single buffered']
    #allocation9 [shape = 's32[1]{0}', space=sflag, size = 0x4, scoped, tag = 'scoped memory for linear_block.1']
    #allocation10 [shape = 'u8[512]{0}', space=vmem, size = 0x400, scoped, tag = 'input window, operand 4, single buffered']
    #allocation11 [shape = 'u8[4096]{0}', space=vmem, size = 0x1000, scoped, tag = 'output window, operand 0, single buffered']
    %10 = vsyncpa [#allocation3], 0
    %11 = vsyncpa [#allocation6], 0
    %12 = vsyncpa [#allocation9], 0
    %13 = vsyncpa [#allocation4], 0
    // Predicated region
    $region2: #{linear_block.1} parent=1 // pred_check
      _
    $region3: #{linear_block.1} parent=1 // pred_check_branch
      %15 = sbr.rel (0) target = $region5
    $region4: #{linear_block.1} parent=1 // pred_region
      %s17 = ssub.s32 128, 128
      %18 = vsyncadd [#allocation3], %s17
      %s20 = sshll.u32 [#allocation2], 4
      %s21 = int_to_ptr.vmem [resolvable:$true] %s20
      %23 = dma.hbm_to_vmem [thread:$0]  %s0, 128, %s21, [#allocation3]
    $region5: #{linear_block.1} parent=1 // pred_fallthru
      _
    // Predicated region
    $region6: #{linear_block.1} parent=1 // pred_check
      _
    $region7: #{linear_block.1} parent=1 // pred_check_branch
      %25 = sbr.rel (0) target = $region9
    $region8: #{linear_block.1} parent=1 // pred_region
      %s27 = ssub.s32 1024, 1024
      %28 = vsyncadd [#allocation6], %s27
      %s29 = sshll.u32 [#allocation5], 4
      %s30 = int_to_ptr.vmem [resolvable:$true] %s29
      %35 = dma.hbm_to_vmem [thread:$0]  %s1, 1024, %s30, [#allocation6], 64, 64, 4
    $region9: #{linear_block.1} parent=1 // pred_fallthru
      _
    // Predicated region
    $region10: #{linear_block.1} parent=1 // pred_check
      _
    $region11: #{linear_block.1} parent=1 // pred_check_branch
      %37 = sbr.rel (0) target = $region13
    $region12: #{linear_block.1} parent=1 // pred_region
      %s39 = ssub.s32 16, 16
      %40 = vsyncadd [#allocation6], %s39
      %s42 = sshll.u32 [#allocation7], 4
      %s43 = int_to_ptr.vmem [resolvable:$true] %s42
      %45 = dma.hbm_to_vmem [thread:$0]  %s2, 16, %s43, [#allocation6]
    $region13: #{linear_block.1} parent=1 // pred_fallthru
      _
    // Predicated region
    $region14: #{linear_block.1} parent=1 // pred_check
      _
    $region15: #{linear_block.1} parent=1 // pred_check_branch
      %47 = sbr.rel (0) target = $region17
    $region16: #{linear_block.1} parent=1 // pred_region
      %s49 = ssub.s32 1024, 1024
      %50 = vsyncadd [#allocation9], %s49
      %s51 = sshll.u32 [#allocation8], 4
      %s52 = int_to_ptr.vmem [resolvable:$true] %s51
      %57 = dma.hbm_to_vmem [thread:$0]  %s3, 1024, %s52, [#allocation9], 64, 64, 4
    $region17: #{linear_block.1} parent=1 // pred_fallthru
      _
    // Predicated region
    $region18: #{linear_block.1} parent=1 // pred_check
      _
    $region19: #{linear_block.1} parent=1 // pred_check_branch
      %59 = sbr.rel (0) target = $region21
    $region20: #{linear_block.1} parent=1 // pred_region
      %s61 = ssub.s32 16, 16
      %62 = vsyncadd [#allocation9], %s61
      %s64 = sshll.u32 [#allocation10], 4
      %s65 = int_to_ptr.vmem [resolvable:$true] %s64
      %67 = dma.hbm_to_vmem [thread:$0]  %s4, 16, %s65, [#allocation9]
    $region21: #{linear_block.1} parent=1 // pred_fallthru
      _
    // Predicated region
    $region22: #{linear_block.1} parent=1 // pred_check
      _
    $region23: #{linear_block.1} parent=1 // pred_check_branch
      %69 = sbr.rel (0) target = $region25
    $region24: #{linear_block.1} parent=1 // pred_region
      %70 = dma.done [#allocation3], 128
    $region25: #{linear_block.1} parent=1 // pred_fallthru
      _
    // Predicated region
    $region26: #{linear_block.1} parent=1 // pred_check
      _
    $region27: #{linear_block.1} parent=1 // pred_check_branch
      %72 = sbr.rel (0) target = $region29
    $region28: #{linear_block.1} parent=1 // pred_region
      %73 = dma.done [#allocation6], 1024
    $region29: #{linear_block.1} parent=1 // pred_fallthru
      _
    // Predicated region
    $region30: #{linear_block.1} parent=1 // pred_check
      _
    $region31: #{linear_block.1} parent=1 // pred_check_branch
      %75 = sbr.rel (0) target = $region33
    $region32: #{linear_block.1} parent=1 // pred_region
      %76 = dma.done [#allocation6], 16
    $region33: #{linear_block.1} parent=1 // pred_fallthru
      _
    // Predicated region
    $region34: #{linear_block.1} parent=1 // pred_check
      _
    $region35: #{linear_block.1} parent=1 // pred_check_branch
      %78 = sbr.rel (0) target = $region37
    $region36: #{linear_block.1} parent=1 // pred_region
      %79 = dma.done [#allocation9], 1024
    $region37: #{linear_block.1} parent=1 // pred_fallthru
      _
    // Predicated region
    $region38: #{linear_block.1} parent=1 // pred_check
      _
    $region39: #{linear_block.1} parent=1 // pred_check_branch
      %81 = sbr.rel (0) target = $region41
    $region40: #{linear_block.1} parent=1 // pred_region
      %82 = dma.done [#allocation9], 16
    $region41: #{linear_block.1} parent=1 // pred_fallthru
      _
    %v84 = vld [vmem:[#allocation2] sm:$0xff]
    %v85 = vpack.c.bf16 %v84, %v84
    %v86 = vld [vmem:[#allocation5] sm:$0xf]
    %v87 = vld [vmem:[#allocation5 + $0x4] sm:$0xf]
    %v88 = vld [vmem:[#allocation5 + $0x8] sm:$0xf]
    %v89 = vld [vmem:[#allocation5 + $0xc] sm:$0xf]
    %v90 = vld [vmem:[#allocation5 + $0x10] sm:$0xf]
    %v91 = vld [vmem:[#allocation5 + $0x14] sm:$0xf]
    %v92 = vld [vmem:[#allocation5 + $0x18] sm:$0xf]
    %v93 = vld [vmem:[#allocation5 + $0x1c] sm:$0xf]
    %v94 = vld [vmem:[#allocation5 + $0x20] sm:$0xf]
    %v95 = vld [vmem:[#allocation5 + $0x24] sm:$0xf]
    %v96 = vld [vmem:[#allocation5 + $0x28] sm:$0xf]
    %v97 = vld [vmem:[#allocation5 + $0x2c] sm:$0xf]
    %v98 = vld [vmem:[#allocation5 + $0x30] sm:$0xf]
    %v99 = vld [vmem:[#allocation5 + $0x34] sm:$0xf]
    %v100 = vld [vmem:[#allocation5 + $0x38] sm:$0xf]
    %v101 = vld [vmem:[#allocation5 + $0x3c] sm:$0xf]
    %v102 = vld [vmem:[#allocation7] sm:$0x1]
    %v104 = vlaneseq
    %v105 = vshrl.u32 %v104, 7
    %v106 = vsub.s32 0, %v105
    %v107 = vrot.slane %v102, %v106
    %v125 = vunpack.c.l.b16 %v86
    %v126 = vunpack.c.l.b16 %v87
    %v127 = vunpack.c.l.b16 %v88
    %v128 = vunpack.c.l.b16 %v89
    %v129 = vunpack.c.l.b16 %v90
    %v130 = vunpack.c.l.b16 %v91
    %v131 = vunpack.c.l.b16 %v92
    %v132 = vunpack.c.l.b16 %v93
    %v133 = vunpack.c.l.b16 %v94
    %v134 = vunpack.c.l.b16 %v95
    %v135 = vunpack.c.l.b16 %v96
    %v136 = vunpack.c.l.b16 %v97
    %v137 = vunpack.c.l.b16 %v98
    %v138 = vunpack.c.l.b16 %v99
    %v139 = vunpack.c.l.b16 %v100
    %v140 = vunpack.c.l.b16 %v101
    %v141 = vpack.c.b16 %v126, %v125
    %v142 = vpack.c.b16 %v128, %v127
    %v143 = vpack.c.b16 %v130, %v129
    %v144 = vpack.c.b16 %v132, %v131
    %v145 = vpack.c.b16 %v134, %v133
    %v146 = vpack.c.b16 %v136, %v135
    %v147 = vpack.c.b16 %v138, %v137
    %v148 = vpack.c.b16 %v140, %v139
    %157 = vmatprep.subr.bf16.mxu0 0
    %158 = vmatpush1.bf16.msra.mxu0 %v141
    %159 = vmatprep.subr.bf16.mxu0 0
    %160 = vmatpush1.bf16.msra.mxu0 %v142
    %161 = vmatprep.subr.bf16.mxu0 0
    %162 = vmatpush1.bf16.msra.mxu0 %v143
    %163 = vmatprep.subr.bf16.mxu0 0
    %164 = vmatpush1.bf16.msra.mxu0 %v144
    %165 = vmatprep.subr.bf16.mxu0 0
    %166 = vmatpush1.bf16.msra.mxu0 %v145
    %167 = vmatprep.subr.bf16.mxu0 0
    %168 = vmatpush1.bf16.msra.mxu0 %v146
    %169 = vmatprep.subr.bf16.mxu0 0
    %170 = vmatpush1.bf16.msra.mxu0 %v147
    %171 = vmatprep.subr.bf16.mxu0 0
    %172 = vmatpush1.bf16.msra.mxu0 %v148
    %173 = vmatprep.subr.bf16.mxu0 0
    %174 = vmatpush1.bf16.msra.mxu0 0
    %175 = vmatprep.subr.bf16.mxu0 0
    %176 = vmatpush1.bf16.msra.mxu0 0
    %177 = vmatprep.subr.bf16.mxu0 0
    %178 = vmatpush1.bf16.msra.mxu0 0
    %179 = vmatprep.subr.bf16.mxu0 0
    %180 = vmatpush1.bf16.msra.mxu0 0
    %181 = vmatprep.subr.bf16.mxu0 0
    %182 = vmatpush1.bf16.msra.mxu0 0
    %183 = vmatprep.subr.bf16.mxu0 0
    %184 = vmatpush1.bf16.msra.mxu0 0
    %185 = vmatprep.subr.bf16.mxu0 0
    %186 = vmatpush1.bf16.msra.mxu0 0
    %187 = vmatprep.subr.bf16.mxu0 0
    %188 = vmatpush1.bf16.msra.mxu0 0
    %189 = vmatprep.mubr.bf16.mxu0 0
    %190 = vmatmul.mubr.bf16.gmra.mrb[0].mxu0 %v85
    %v191 = vpop.f32.mrb[0].mxu0
    %v192 = vadd.f32 %v107, %v191
    %v193 = vpop.f32.mrb[0].mxu0
    %v194 = vpop.f32.mrb[0].mxu0
    %v195 = vpop.f32.mrb[0].mxu0
    %196 = vdwg.mxu0
    %vm197 = vcmp.gt.f32.partialorder %v192, 0.0
    %v198 = vmul.f32 %v192, 0.01
    %v199 = vsel %vm197, %v192, %v198
    %v200 = vpack.c.bf16 %v199, %v199
    %v201 = vld [vmem:[#allocation8] sm:$0xf]
    %v202 = vld [vmem:[#allocation8 + $0x4] sm:$0xf]
    %v203 = vld [vmem:[#allocation8 + $0x8] sm:$0xf]
    %v204 = vld [vmem:[#allocation8 + $0xc] sm:$0xf]
    %v205 = vld [vmem:[#allocation8 + $0x10] sm:$0xf]
    %v206 = vld [vmem:[#allocation8 + $0x14] sm:$0xf]
    %v207 = vld [vmem:[#allocation8 + $0x18] sm:$0xf]
    %v208 = vld [vmem:[#allocation8 + $0x1c] sm:$0xf]
    %v209 = vld [vmem:[#allocation8 + $0x20] sm:$0xf]
    %v210 = vld [vmem:[#allocation8 + $0x24] sm:$0xf]
    %v211 = vld [vmem:[#allocation8 + $0x28] sm:$0xf]
    %v212 = vld [vmem:[#allocation8 + $0x2c] sm:$0xf]
    %v213 = vld [vmem:[#allocation8 + $0x30] sm:$0xf]
    %v214 = vld [vmem:[#allocation8 + $0x34] sm:$0xf]
    %v215 = vld [vmem:[#allocation8 + $0x38] sm:$0xf]
    %v216 = vld [vmem:[#allocation8 + $0x3c] sm:$0xf]
    %v217 = vld [vmem:[#allocation10] sm:$0x1]
    %v219 = vlaneseq
    %v220 = vshrl.u32 %v219, 7
    %v221 = vsub.s32 0, %v220
    %v222 = vrot.slane %v217, %v221
    %v240 = vunpack.c.l.b16 %v201
    %v241 = vunpack.c.l.b16 %v202
    %v242 = vunpack.c.l.b16 %v203
    %v243 = vunpack.c.l.b16 %v204
    %v244 = vunpack.c.l.b16 %v205
    %v245 = vunpack.c.l.b16 %v206
    %v246 = vunpack.c.l.b16 %v207
    %v247 = vunpack.c.l.b16 %v208
    %v248 = vunpack.c.l.b16 %v209
    %v249 = vunpack.c.l.b16 %v210
    %v250 = vunpack.c.l.b16 %v211
    %v251 = vunpack.c.l.b16 %v212
    %v252 = vunpack.c.l.b16 %v213
    %v253 = vunpack.c.l.b16 %v214
    %v254 = vunpack.c.l.b16 %v215
    %v255 = vunpack.c.l.b16 %v216
    %v256 = vpack.c.b16 %v241, %v240
    %v257 = vpack.c.b16 %v243, %v242
    %v258 = vpack.c.b16 %v245, %v244
    %v259 = vpack.c.b16 %v247, %v246
    %v260 = vpack.c.b16 %v249, %v248
    %v261 = vpack.c.b16 %v251, %v250
    %v262 = vpack.c.b16 %v253, %v252
    %v263 = vpack.c.b16 %v255, %v254
    %272 = vmatprep.subr.bf16.mxu0 0
    %273 = vmatpush1.bf16.msra.mxu0 %v256
    %274 = vmatprep.subr.bf16.mxu0 0
    %275 = vmatpush1.bf16.msra.mxu0 %v257
    %276 = vmatprep.subr.bf16.mxu0 0
    %277 = vmatpush1.bf16.msra.mxu0 %v258
    %278 = vmatprep.subr.bf16.mxu0 0
    %279 = vmatpush1.bf16.msra.mxu0 %v259
    %280 = vmatprep.subr.bf16.mxu0 0
    %281 = vmatpush1.bf16.msra.mxu0 %v260
    %282 = vmatprep.subr.bf16.mxu0 0
    %283 = vmatpush1.bf16.msra.mxu0 %v261
    %284 = vmatprep.subr.bf16.mxu0 0
    %285 = vmatpush1.bf16.msra.mxu0 %v262
    %286 = vmatprep.subr.bf16.mxu0 0
    %287 = vmatpush1.bf16.msra.mxu0 %v263
    %288 = vmatprep.subr.bf16.mxu0 0
    %289 = vmatpush1.bf16.msra.mxu0 0
    %290 = vmatprep.subr.bf16.mxu0 0
    %291 = vmatpush1.bf16.msra.mxu0 0
    %292 = vmatprep.subr.bf16.mxu0 0
    %293 = vmatpush1.bf16.msra.mxu0 0
    %294 = vmatprep.subr.bf16.mxu0 0
    %295 = vmatpush1.bf16.msra.mxu0 0
    %296 = vmatprep.subr.bf16.mxu0 0
    %297 = vmatpush1.bf16.msra.mxu0 0
    %298 = vmatprep.subr.bf16.mxu0 0
    %299 = vmatpush1.bf16.msra.mxu0 0
    %300 = vmatprep.subr.bf16.mxu0 0
    %301 = vmatpush1.bf16.msra.mxu0 0
    %302 = vmatprep.subr.bf16.mxu0 0
    %303 = vmatpush1.bf16.msra.mxu0 0
    %304 = vmatprep.mubr.bf16.mxu0 0
    %305 = vmatmul.mubr.bf16.gmra.mrb[0].mxu0 %v200
    %v306 = vpop.f32.mrb[0].mxu0
    %v307 = vadd.f32 %v222, %v306
    %v308 = vpop.f32.mrb[0].mxu0
    %v309 = vpop.f32.mrb[0].mxu0
    %v310 = vpop.f32.mrb[0].mxu0
    %311 = vdwg.mxu0
    %v312 = vadd.f32 %v84, %v307
    %vm313 = vcmp.gt.f32.partialorder %v312, 0.0
    %v314 = vmul.f32 %v312, 0.01
    %v315 = vsel %vm313, %v312, %v314
    %316 = vst [vmem:[#allocation11] sm:$0xff] %v315
    // Predicated region
    $region42: #{linear_block.1} parent=1 // pred_check
      _
    $region43: #{linear_block.1} parent=1 // pred_check_branch
      %318 = sbr.rel (0) target = $region45
    $region44: #{linear_block.1} parent=1 // pred_region
      %s320 = ssub.s32 128, 128
      %321 = vsyncadd [#allocation4], %s320
      %s323 = sshll.u32 [#allocation11], 4
      %s324 = int_to_ptr.vmem [resolvable:$true] %s323
      %326 = dma.vmem_to_hbm [thread:$0]  %s324, 128, %s5, [#allocation4]
    $region45: #{linear_block.1} parent=1 // pred_fallthru
      _
    // Predicated region
    $region46: #{linear_block.1} parent=1 // pred_check
      _
    $region47: #{linear_block.1} parent=1 // pred_check_branch
      %328 = sbr.rel (0) target = $region49
    $region48: #{linear_block.1} parent=1 // pred_region
      %329 = dma.done [#allocation4], 128
    $region49: #{linear_block.1} parent=1 // pred_fallthru
      _
    %330 = vsyncpa [#allocation3], 1
    %331 = vsyncpa [#allocation6], 1
    %332 = vsyncpa [#allocation9], 1
    %333 = vsyncpa [#allocation4], 1

</llo_original>
